<compile_context>
chip_gen: v7x
topology: tpu7x:2x2x1
jax: 0.10.0
libtpu: 0.0.40
codegen_flags: <defaults>
</compile_context>

<pallas_src>
import functools

import jax
import jax.numpy as jnp
from jax import lax
from jax.experimental import pallas as pl
from jax.experimental.pallas import tpu as pltpu


def _bert_self_output_kernel(x_ref, res_ref, w_ref, b_ref, g_ref, beta_ref,
                             o_ref, *, eps: float, matmul_dtype):
    # x_ref:    (TM, H) tile of hidden_states rows
    # res_ref:  (TM, H) matching tile of input_tensor (residual)
    # w_ref:    (H, H)  dense weight, pre-transposed to (in, out), ideally bf16
    # b_ref:    (1, H)  dense bias
    # g_ref:    (1, H)  LayerNorm gamma
    # beta_ref: (1, H)  LayerNorm beta

    x = x_ref[...]
    if x.dtype != matmul_dtype:
        x = x.astype(matmul_dtype)          # bf16 MXU fast path when model is f32

    # Dense: low-precision operands on the MXU, f32 accumulation.
    h = jnp.dot(x, w_ref[...], preferred_element_type=jnp.float32)

    # Dropout in eval/inference mode is identity.
    # TODO(synk): training-mode dropout (pltpu.prng_random_bits mask) not emitted.

    # Residual + bias folded into a single epilogue pass, f32.
    y = h + (res_ref[...].astype(jnp.float32) + b_ref[...].astype(jnp.float32))

    # One-pass LayerNorm statistics: var = E[y^2] - mean^2 (clamped; f32 acc).
    mean = jnp.mean(y, axis=-1, keepdims=True)
    mean_sq = jnp.mean(y * y, axis=-1, keepdims=True)
    var = jnp.maximum(mean_sq - mean * mean, 0.0)
    inv = lax.rsqrt(var + eps)                      # EUP slot, effectively free
    out = (y - mean) * inv * g_ref[...].astype(jnp.float32) \
        + beta_ref[...].astype(jnp.float32)

    o_ref[...] = out.astype(o_ref.dtype)


def _round_up(x, m):
    return ((x + m - 1) // m) * m


def _tpu_generation():
    """Best-effort TPU generation sniff (only tunes tile size / VMEM cap)."""
    try:
        kind = jax.devices()[0].device_kind.lower()
    except Exception:
        return 6
    if "7" in kind:
        return 7
    if "v6" in kind or "6e" in kind:
        return 6
    if "v5" in kind or "5e" in kind or "5p" in kind or "lite" in kind:
        return 5
    return 6


def _pick_row_tile(n_rows, dtype, generation):
    itemsize = jnp.dtype(dtype).itemsize
    if generation >= 7:
        target = 1024            # amortize per-step overhead against 3.2 TB/s HBM
    else:
        target = 512 if itemsize <= 2 else 256
    return max(8, min(target, _round_up(n_rows, 8)))


def bert_self_output(hidden_states, input_tensor, weight_t, bias, gamma, beta,
                     *, eps=1e-12, row_tile=None, prefer_bf16_matmul=True):
    """Fused dense + (eval-mode) dropout + residual + LayerNorm.

    hidden_states, input_tensor: (B, S, H)
    weight_t: (H, H) dense weight ALREADY transposed to (in, out) layout;
              do `weight.T` (and ideally `.astype(bf16)`) once at
              parameter-load time, not per call.
    bias, gamma, beta: (H,)
    """
    B, S, H = hidden_states.shape
    out_dtype = hidden_states.dtype

    # NOTE: H should be a multiple of 128 for unmasked lane-dense stores
    # (BERT-base/large 768/1024 are fine).  Smaller H still works because the
    # block covers the full last dim.  For very large H (f32 >= ~2048^2 weight)
    # an output-column grid axis would be needed to keep the weight in VMEM.
    w_mat = weight_t
    if prefer_bf16_matmul and w_mat.dtype == jnp.float32:
        # Fallback; prefer casting once at parameter-load time.
        w_mat = w_mat.astype(jnp.bfloat16)
    matmul_dtype = w_mat.dtype

    x2 = hidden_states.reshape(B * S, H)
    r2 = input_tensor.reshape(B * S, H)
    b2 = bias.reshape(1, H)
    g2 = gamma.reshape(1, H)
    be2 = beta.reshape(1, H)

    M = B * S
    gen = _tpu_generation()
    if row_tile is None:
        row_tile = _pick_row_tile(M, x2.dtype, gen)
    row_tile = max(8, _round_up(row_tile, 8))

    # No host-side padding: Pallas masks the ragged last block.
    grid_len = pl.cdiv(M, row_tile)

    in_bytes = jnp.dtype(x2.dtype).itemsize
    out_bytes = jnp.dtype(out_dtype).itemsize
    w_bytes = jnp.dtype(w_mat.dtype).itemsize
    # x/res/out double-buffered at native width, weight + params single-buffered,
    # plus the f32 kernel intermediates (h, y, out, stats).
    vmem_est = (2 * 2 * row_tile * H * in_bytes
                + 2 * row_tile * H * out_bytes
                + H * H * w_bytes
                + 3 * H * 4
                + 4 * row_tile * H * 4)
    vmem_cap = (64 << 20) if gen >= 7 else (128 << 20)
    vmem_limit = int(min(max(vmem_est + (8 << 20), 32 << 20), vmem_cap))

    cost = pl.CostEstimate(
        flops=2 * M * H * H,
        transcendentals=M,                               # one rsqrt per row
        bytes_accessed=(2 * M * H * in_bytes + M * H * out_bytes
                        + H * H * w_bytes + 3 * H * 4),
    )

    out2 = pl.pallas_call(
        functools.partial(_bert_self_output_kernel, eps=eps,
                          matmul_dtype=matmul_dtype),
        out_shape=jax.ShapeDtypeStruct((M, H), out_dtype),
        grid_spec=pltpu.PrefetchScalarGridSpec(
            num_scalar_prefetch=0,
            grid=(grid_len,),
            in_specs=[
                pl.BlockSpec((row_tile, H), lambda i: (i, 0)),   # hidden_states
                pl.BlockSpec((row_tile, H), lambda i: (i, 0)),   # residual
                # Grid-invariant operands: single-buffered, DMA'd once.
                pl.BlockSpec((H, H), lambda i: (0, 0),
                             pipeline_mode=pl.Buffered(1)),      # weight (in,out)
                pl.BlockSpec((1, H), lambda i: (0, 0),
                             pipeline_mode=pl.Buffered(1)),      # bias
                pl.BlockSpec((1, H), lambda i: (0, 0),
                             pipeline_mode=pl.Buffered(1)),      # gamma
                pl.BlockSpec((1, H), lambda i: (0, 0),
                             pipeline_mode=pl.Buffered(1)),      # beta
            ],
            out_specs=pl.BlockSpec((row_tile, H), lambda i: (i, 0)),
        ),
        compiler_params=pltpu.CompilerParams(
            # Row axis is independent -> "parallel" (lets v7x megacore split it;
            # harmless on single-TC chips).
            dimension_semantics=("parallel",),
            vmem_limit_bytes=vmem_limit),
        cost_estimate=cost,
    )(x2, r2, w_mat, b2, g2, be2)

    return out2.reshape(B, S, H)


def _reference(hidden_states, input_tensor, weight, bias, gamma, beta, *,
               eps=1e-12, matmul_dtype=None):
    x, w = hidden_states, weight
    if matmul_dtype is not None:
        x = x.astype(matmul_dtype)
        w = w.astype(matmul_dtype)
    h = jnp.einsum("bsh,oh->bso", x, w,
                   preferred_element_type=jnp.float32) + bias
    y = h + input_tensor
    mean = jnp.mean(y, axis=-1, keepdims=True)
    var = jnp.mean((y - mean) ** 2, axis=-1, keepdims=True)
    return (y - mean) * lax.rsqrt(var + eps) * gamma + beta


if __name__ == "__main__":
    B, S, H = 2, 8, 32
    eps = 1e-12

    key = jax.random.PRNGKey(0)
    k1, k2, k3, k4 = jax.random.split(key, 4)

    hidden_states = jax.random.normal(k1, (B, S, H), dtype=jnp.float32)
    input_tensor = jax.random.normal(k2, (B, S, H), dtype=jnp.float32)

    # PyTorch nn.Linear weight layout is (out, in); transpose + cast to bf16
    # ONCE at parameter-load time, not per call.
    weight = jax.random.normal(k3, (H, H), dtype=jnp.float32) * (1.0 / jnp.sqrt(H))
    weight_t = jnp.asarray(weight.T, dtype=jnp.bfloat16)      # (in, out), one-time
    bias = jax.random.normal(k4, (H,), dtype=jnp.float32) * 0.01
    gamma = jnp.ones((H,), dtype=jnp.float32)
    beta = jnp.zeros((H,), dtype=jnp.float32)

    out = bert_self_output(hidden_states, input_tensor, weight_t, bias, gamma,
                           beta, eps=eps)
    out = jax.block_until_ready(out)
    assert out.shape == (B, S, H)

    # Reference uses the same bf16 matmul operands (f32 accumulation).
    ref = _reference(hidden_states, input_tensor, weight, bias, gamma, beta,
                     eps=eps, matmul_dtype=jnp.bfloat16)
    assert jnp.allclose(out, ref, atol=2e-3, rtol=2e-3), "mismatch vs reference"

    # Ragged-grid check: M not a multiple of row_tile, no host-side padding.
    S2 = 5
    hs2 = jax.random.normal(k1, (B, S2, H), dtype=jnp.float32)
    it2 = jax.random.normal(k2, (B, S2, H), dtype=jnp.float32)
    out2 = bert_self_output(hs2, it2, weight_t, bias, gamma, beta,
                            eps=eps, row_tile=8)
    out2 = jax.block_until_ready(out2)
    ref2 = _reference(hs2, it2, weight, bias, gamma, beta, eps=eps,
                      matmul_dtype=jnp.bfloat16)
    assert out2.shape == (B, S2, H)
    assert jnp.allclose(out2, ref2, atol=2e-3, rtol=2e-3), "ragged mismatch"

    print("KERNEL_OK")
</pallas_src>

<mosaic_0001>
module attributes {stable_mosaic.version = 11 : i64} {
  func.func @_bert_self_output_kernel(%arg0: i32, %arg1: memref<16x32xf32, #tpu.memory_space<vmem>>, %arg2: memref<16x32xf32, #tpu.memory_space<vmem>>, %arg3: memref<32x32xbf16, #tpu.memory_space<vmem>>, %arg4: memref<1x32xf32, #tpu.memory_space<vmem>>, %arg5: memref<1x32xf32, #tpu.memory_space<vmem>>, %arg6: memref<1x32xf32, #tpu.memory_space<vmem>>, %arg7: memref<16x32xf32, #tpu.memory_space<vmem>>) attributes {dimension_semantics = [#tpu.dimension_semantics<parallel>], iteration_bounds = array<i64: 1>, scalar_prefetch = 0 : i64, scratch_operands = 0 : i64, tpu.core_type = #tpu.core_type<tc>, window_params = [{transform_indices = @transform_0, window_bounds = array<i64: 16, 32>}, {transform_indices = @transform_1, window_bounds = array<i64: 16, 32>}, {pipeline_mode = #tpu.pipeline_mode<synchronous>, transform_indices = @transform_2, window_bounds = array<i64: 32, 32>}, {pipeline_mode = #tpu.pipeline_mode<synchronous>, transform_indices = @transform_3, window_bounds = array<i64: 1, 32>}, {pipeline_mode = #tpu.pipeline_mode<synchronous>, transform_indices = @transform_4, window_bounds = array<i64: 1, 32>}, {pipeline_mode = #tpu.pipeline_mode<synchronous>, transform_indices = @transform_5, window_bounds = array<i64: 1, 32>}, {transform_indices = @transform_6, window_bounds = array<i64: 16, 32>}]} {
    %c0 = arith.constant 0 : index
    %c0_0 = arith.constant 0 : index
    %0 = vector.load %arg1[%c0, %c0_0] : memref<16x32xf32, #tpu.memory_space<vmem>>, vector<16x32xf32>
    %1 = arith.truncf %0 : vector<16x32xf32> to vector<16x32xbf16>
    %c0_1 = arith.constant 0 : index
    %c0_2 = arith.constant 0 : index
    %2 = vector.load %arg3[%c0_1, %c0_2] : memref<32x32xbf16, #tpu.memory_space<vmem>>, vector<32x32xbf16>
    %cst = arith.constant dense<0.000000e+00> : vector<16x32xf32>
    %3 = tpu.matmul %1, %2, %cst {dimension_numbers = #tpu.dot_dimension_numbers<[1], [0], [0], [1], [0, 0, 1, 1], [], []>} : vector<16x32xbf16>, vector<32x32xbf16>, vector<16x32xf32> -> vector<16x32xf32>
    %c0_3 = arith.constant 0 : index
    %c0_4 = arith.constant 0 : index
    %4 = vector.load %arg2[%c0_3, %c0_4] : memref<16x32xf32, #tpu.memory_space<vmem>>, vector<16x32xf32>
    %c0_5 = arith.constant 0 : index
    %c0_6 = arith.constant 0 : index
    %5 = vector.load %arg4[%c0_5, %c0_6] : memref<1x32xf32, #tpu.memory_space<vmem>>, vector<1x32xf32>
    %6 = vector.broadcast %5 : vector<1x32xf32> to vector<16x32xf32>
    %7 = arith.addf %4, %6 : vector<16x32xf32>
    %8 = arith.addf %3, %7 : vector<16x32xf32>
    %cst_7 = arith.constant dense<0.000000e+00> : vector<16xf32>
    %9 = vector.multi_reduction <add>, %8, %cst_7 [1] : vector<16x32xf32> to vector<16xf32>
    %10 = vector.shape_cast %9 : vector<16xf32> to vector<16x1xf32>
    %cst_8 = arith.constant 3.200000e+01 : f32
    %11 = vector.broadcast %cst_8 : f32 to vector<16x1xf32>
    %12 = arith.divf %10, %11 : vector<16x1xf32>
    %13 = arith.mulf %8, %8 : vector<16x32xf32>
    %cst_9 = arith.constant dense<0.000000e+00> : vector<16xf32>
    %14 = vector.multi_reduction <add>, %13, %cst_9 [1] : vector<16x32xf32> to vector<16xf32>
    %15 = vector.shape_cast %14 : vector<16xf32> to vector<16x1xf32>
    %cst_10 = arith.constant 3.200000e+01 : f32
    %16 = vector.broadcast %cst_10 : f32 to vector<16x1xf32>
    %17 = arith.divf %15, %16 : vector<16x1xf32>
    %18 = arith.mulf %12, %12 : vector<16x1xf32>
    %19 = arith.subf %17, %18 : vector<16x1xf32>
    %cst_11 = arith.constant 0.000000e+00 : f32
    %20 = vector.broadcast %cst_11 : f32 to vector<16x1xf32>
    %21 = arith.maximumf %19, %20 : vector<16x1xf32>
    %cst_12 = arith.constant 9.99999996E-13 : f32
    %22 = vector.broadcast %cst_12 : f32 to vector<16x1xf32>
    %23 = arith.addf %21, %22 : vector<16x1xf32>
    %24 = math.rsqrt %23 : vector<16x1xf32>
    %25 = vector.broadcast %12 : vector<16x1xf32> to vector<16x32xf32>
    %26 = arith.subf %8, %25 : vector<16x32xf32>
    %27 = vector.broadcast %24 : vector<16x1xf32> to vector<16x32xf32>
    %28 = arith.mulf %26, %27 : vector<16x32xf32>
    %c0_13 = arith.constant 0 : index
    %c0_14 = arith.constant 0 : index
    %29 = vector.load %arg5[%c0_13, %c0_14] : memref<1x32xf32, #tpu.memory_space<vmem>>, vector<1x32xf32>
    %30 = vector.broadcast %29 : vector<1x32xf32> to vector<16x32xf32>
    %31 = arith.mulf %28, %30 : vector<16x32xf32>
    %c0_15 = arith.constant 0 : index
    %c0_16 = arith.constant 0 : index
    %32 = vector.load %arg6[%c0_15, %c0_16] : memref<1x32xf32, #tpu.memory_space<vmem>>, vector<1x32xf32>
    %33 = vector.broadcast %32 : vector<1x32xf32> to vector<16x32xf32>
    %34 = arith.addf %31, %33 : vector<16x32xf32>
    %c0_17 = arith.constant 0 : index
    %c0_18 = arith.constant 0 : index
    %35 = vector.load %arg7[%c0_17, %c0_18] : memref<16x32xf32, #tpu.memory_space<vmem>>, vector<16x32xf32>
    tpu.vector_store %arg7[%c0_17, %c0_18], %34 {strides = array<i32>} : memref<16x32xf32, #tpu.memory_space<vmem>>, vector<16x32xf32>,
    return
  }
  func.func @transform_0(%arg0: i32) -> (i32, i32) {
    %c0_i32 = arith.constant 0 : i32
    %c0_i32_0 = arith.constant 0 : i32
    return %arg0, %c0_i32 : i32, i32
  }
  func.func @transform_1(%arg0: i32) -> (i32, i32) {
    %c0_i32 = arith.constant 0 : i32
    %c0_i32_0 = arith.constant 0 : i32
    return %arg0, %c0_i32 : i32, i32
  }
  func.func @transform_2(%arg0: i32) -> (i32, i32) {
    %c0_i32 = arith.constant 0 : i32
    %c0_i32_0 = arith.constant 0 : i32
    %c0_i32_1 = arith.constant 0 : i32
    return %c0_i32, %c0_i32_0 : i32, i32
  }
  func.func @transform_3(%arg0: i32) -> (i32, i32) {
    %c0_i32 = arith.constant 0 : i32
    %c0_i32_0 = arith.constant 0 : i32
    %c0_i32_1 = arith.constant 0 : i32
    return %c0_i32, %c0_i32_0 : i32, i32
  }
  func.func @transform_4(%arg0: i32) -> (i32, i32) {
    %c0_i32 = arith.constant 0 : i32
    %c0_i32_0 = arith.constant 0 : i32
    %c0_i32_1 = arith.constant 0 : i32
    return %c0_i32, %c0_i32_0 : i32, i32
  }
  func.func @transform_5(%arg0: i32) -> (i32, i32) {
    %c0_i32 = arith.constant 0 : i32
    %c0_i32_0 = arith.constant 0 : i32
    %c0_i32_1 = arith.constant 0 : i32
    return %c0_i32, %c0_i32_0 : i32, i32
  }
  func.func @transform_6(%arg0: i32) -> (i32, i32) {
    %c0_i32 = arith.constant 0 : i32
    %c0_i32_0 = arith.constant 0 : i32
    return %arg0, %c0_i32 : i32, i32
  }
}

</mosaic_0001>

<llo_original>
// kernel: tpu_custom_call.1
$region0: #{tpu_custom_call.1}
  #allocation0 [shape = 'u32[]', space=smem, size = 0x4, offset = 0x4, fixed_abs, tag = 'smem constant byte address 0x4 - core index']
  #allocation1 [shape = 'u32[144,128]{1,0:T(1,128)}', space=vmem, size = 0x12000, scoped, tag = 'internal scratch']
  %s0 = inlined_call_operand.hbm [shape: f32[16,32], index: 0, kind: input, shape index: {}]
  %s1 = inlined_call_operand.hbm [shape: f32[16,32], index: 1, kind: input, shape index: {}]
  %s2 = inlined_call_operand.hbm [shape: bf16[32,32], index: 2, kind: input, shape index: {}]
  %s3 = inlined_call_operand.vmem [shape: f32[1,32], index: 3, kind: input, shape index: {}]
  %s4 = inlined_call_operand.vmem [shape: f32[1,32], index: 4, kind: input, shape index: {}]
  %s5 = inlined_call_operand.vmem [shape: f32[1,32], index: 5, kind: input, shape index: {}]
  %s6 = inlined_call_operand.hbm [shape: f32[16,32], index: 6, kind: output, shape index: {}]
  %s7 = sld [smem:[#allocation0]]
  $region46: #{tpu_custom_call.1} parent=0
    _
  %s9 = ssub.s32 1, %s7
  %s10 = scalar_select 0, %s9, %s7
  $region1: #{tpu_custom_call.1} parent=0
    #allocation2 [shape = 'u8[8192]{0}', space=vmem, size = 0x2000, scoped, tag = 'input window, operand 0, single buffered']
    #allocation3 [shape = 's32[1]{0}', space=sflag, size = 0x4, scoped, tag = 'scoped memory for tpu_custom_call.1']
    #allocation4 [shape = 's32[1]{0}', space=sflag, size = 0x4, scoped, tag = 'scoped memory for tpu_custom_call.1']
    #allocation5 [shape = 'u8[8192]{0}', space=vmem, size = 0x2000, scoped, tag = 'input window, operand 1, single buffered']
    #allocation6 [shape = 's32[1]{0}', space=sflag, size = 0x4, scoped, tag = 'scoped memory for tpu_custom_call.1']
    #allocation7 [shape = 'u8[8192]{0}', space=vmem, size = 0x2000, scoped, tag = 'input window, operand 2, single buffered']
    #allocation8 [shape = 'u8[8192]{0}', space=vmem, size = 0x2000, scoped, tag = 'output window, operand 0, single buffered']
    %11 = vsyncpa [#allocation3], 0
    %12 = vsyncpa [#allocation6], 0
    %13 = vsyncpa [#allocation4], 0
    // Predicated region
    $region2: #{tpu_custom_call.1} parent=1 // pred_check
      _
    $region3: #{tpu_custom_call.1} parent=1 // pred_check_branch
      %15 = sbr.rel (0) target = $region5
    $region4: #{tpu_custom_call.1} parent=1 // pred_region
      %s17 = ssub.s32 256, 256
      %18 = vsyncadd [#allocation3], %s17
      %s19 = sshll.u32 [#allocation2], 4
      %s20 = int_to_ptr.vmem [resolvable:$true] %s19
      %25 = dma.hbm_to_vmem [thread:$0]  %s0, 256, %s20, [#allocation3], 128, 128, 8
    $region5: #{tpu_custom_call.1} parent=1 // pred_fallthru
      _
    // Predicated region
    $region6: #{tpu_custom_call.1} parent=1 // pred_check
      _
    $region7: #{tpu_custom_call.1} parent=1 // pred_check_branch
      %27 = sbr.rel (0) target = $region9
    $region8: #{tpu_custom_call.1} parent=1 // pred_region
      %s29 = ssub.s32 256, 256
      %30 = vsyncadd [#allocation6], %s29
      %s31 = sshll.u32 [#allocation5], 4
      %s32 = int_to_ptr.vmem [resolvable:$true] %s31
      %37 = dma.hbm_to_vmem [thread:$0]  %s1, 256, %s32, [#allocation6], 128, 128, 8
    $region9: #{tpu_custom_call.1} parent=1 // pred_fallthru
      _
    // Predicated region
    $region10: #{tpu_custom_call.1} parent=1 // pred_check
      _
    $region11: #{tpu_custom_call.1} parent=1 // pred_check_branch
      %39 = sbr.rel (0) target = $region13
    $region12: #{tpu_custom_call.1} parent=1 // pred_region
      %s41 = ssub.s32 256, 256
      %42 = vsyncadd [#allocation6], %s41
      %s43 = sshll.u32 [#allocation7], 4
      %s44 = int_to_ptr.vmem [resolvable:$true] %s43
      %49 = dma.hbm_to_vmem [thread:$0]  %s2, 256, %s44, [#allocation6], 64, 64, 4
    $region13: #{tpu_custom_call.1} parent=1 // pred_fallthru
      _
    // Predicated region
    $region14: #{tpu_custom_call.1} parent=1 // pred_check
      _
    $region15: #{tpu_custom_call.1} parent=1 // pred_check_branch
      %51 = sbr.rel (0) target = $region17
    $region16: #{tpu_custom_call.1} parent=1 // pred_region
      _
    $region17: #{tpu_custom_call.1} parent=1 // pred_fallthru
      _
    // Predicated region
    $region18: #{tpu_custom_call.1} parent=1 // pred_check
      _
    $region19: #{tpu_custom_call.1} parent=1 // pred_check_branch
      %53 = sbr.rel (0) target = $region21
    $region20: #{tpu_custom_call.1} parent=1 // pred_region
      _
    $region21: #{tpu_custom_call.1} parent=1 // pred_fallthru
      _
    // Predicated region
    $region22: #{tpu_custom_call.1} parent=1 // pred_check
      _
    $region23: #{tpu_custom_call.1} parent=1 // pred_check_branch
      %55 = sbr.rel (0) target = $region25
    $region24: #{tpu_custom_call.1} parent=1 // pred_region
      _
    $region25: #{tpu_custom_call.1} parent=1 // pred_fallthru
      _
    // Predicated region
    $region26: #{tpu_custom_call.1} parent=1 // pred_check
      _
    $region27: #{tpu_custom_call.1} parent=1 // pred_check_branch
      %57 = sbr.rel (0) target = $region29
    $region28: #{tpu_custom_call.1} parent=1 // pred_region
      %58 = dma.done [#allocation3], 256
    $region29: #{tpu_custom_call.1} parent=1 // pred_fallthru
      _
    // Predicated region
    $region30: #{tpu_custom_call.1} parent=1 // pred_check
      _
    $region31: #{tpu_custom_call.1} parent=1 // pred_check_branch
      %60 = sbr.rel (0) target = $region33
    $region32: #{tpu_custom_call.1} parent=1 // pred_region
      %61 = dma.done [#allocation6], 256
    $region33: #{tpu_custom_call.1} parent=1 // pred_fallthru
      _
    // Predicated region
    $region34: #{tpu_custom_call.1} parent=1 // pred_check
      _
    $region35: #{tpu_custom_call.1} parent=1 // pred_check_branch
      %63 = sbr.rel (0) target = $region37
    $region36: #{tpu_custom_call.1} parent=1 // pred_region
      %64 = dma.done [#allocation6], 256
    $region37: #{tpu_custom_call.1} parent=1 // pred_fallthru
      _
    %v66 = vld [vmem:[#allocation2] sm:$0xff]
    %v67 = vld [vmem:[#allocation2 + $0x8] sm:$0xff]
    %v68 = vpack.c.bf16 %v67, %v66
    %v69 = vld [vmem:[#allocation7] sm:$0xf]
    %v70 = vld [vmem:[#allocation7 + $0x4] sm:$0xf]
    %v71 = vld [vmem:[#allocation7 + $0x8] sm:$0xf]
    %v72 = vld [vmem:[#allocation7 + $0xc] sm:$0xf]
    %v73 = vld [vmem:[#allocation5] sm:$0xff]
    %v74 = vld [vmem:[#allocation5 + $0x8] sm:$0xff]
    %v75 = vld [vmem:[%s3] sm:$0x1]
    %v77 = vlaneseq
    %v78 = vshrl.u32 %v77, 7
    %v79 = vsub.s32 0, %v78
    %v80 = vrot.slane %v75, %v79
    %v82 = vadd.f32 %v73, %v80
    %v83 = vadd.f32 %v74, %v80
    %v88 = vunpack.c.l.b16 %v69
    %v89 = vunpack.c.l.b16 %v70
    %v90 = vunpack.c.l.b16 %v71
    %v91 = vunpack.c.l.b16 %v72
    %v92 = vpack.c.b16 %v89, %v88
    %v93 = vpack.c.b16 %v91, %v90
    %vm96 = vcmask 261120
    %v98 = vsel %vm96, %v68, 0
    %100 = vmatprep.subr.bf16.mxu0 0
    %101 = vmatpush1.bf16.msra.mxu0 %v92
    %102 = vmatprep.subr.bf16.mxu0 0
    %103 = vmatpush1.bf16.msra.mxu0 %v93
    %104 = vmatprep.subr.bf16.mxu0 0
    %105 = vmatpush1.bf16.msra.mxu0 0
    %106 = vmatprep.subr.bf16.mxu0 0
    %107 = vmatpush1.bf16.msra.mxu0 0
    %108 = vmatprep.subr.bf16.mxu0 0
    %109 = vmatpush1.bf16.msra.mxu0 0
    %110 = vmatprep.subr.bf16.mxu0 0
    %111 = vmatpush1.bf16.msra.mxu0 0
    %112 = vmatprep.subr.bf16.mxu0 0
    %113 = vmatpush1.bf16.msra.mxu0 0
    %114 = vmatprep.subr.bf16.mxu0 0
    %115 = vmatpush1.bf16.msra.mxu0 0
    %116 = vmatprep.subr.bf16.mxu0 0
    %117 = vmatpush1.bf16.msra.mxu0 0
    %118 = vmatprep.subr.bf16.mxu0 0
    %119 = vmatpush1.bf16.msra.mxu0 0
    %120 = vmatprep.subr.bf16.mxu0 0
    %121 = vmatpush1.bf16.msra.mxu0 0
    %122 = vmatprep.subr.bf16.mxu0 0
    %123 = vmatpush1.bf16.msra.mxu0 0
    %124 = vmatprep.subr.bf16.mxu0 0
    %125 = vmatpush1.bf16.msra.mxu0 0
    %126 = vmatprep.subr.bf16.mxu0 0
    %127 = vmatpush1.bf16.msra.mxu0 0
    %128 = vmatprep.subr.bf16.mxu0 0
    %129 = vmatpush1.bf16.msra.mxu0 0
    %130 = vmatprep.subr.bf16.mxu0 0
    %131 = vmatpush1.bf16.msra.mxu0 0
    %132 = vmatprep.mubr.bf16.mxu0 0
    %133 = vmatmul.mubr.bf16.gmra.mrb[0].mxu0 %v98
    %v134 = vpop.f32.mrb[0].mxu0
    %v135 = vadd.f32 %v82, %v134
    %v136 = vpop.f32.mrb[0].mxu0
    %v137 = vpop.f32.mrb[0].mxu0
    %v138 = vadd.f32 %v83, %v137
    %v139 = vpop.f32.mrb[0].mxu0
    %140 = vdwg.mxu0
    %v141 = vsel %vm96, %v135, 0.0
    %142 = vadd.xlane.f32.xlu0 %v141
    %v143 = vpop.xlane.xlu0 %142
    %v144 = vsel %vm96, %v138, 0.0
    %145 = vadd.xlane.f32.xlu0 %v144
    %v146 = vpop.xlane.xlu0 %145
    %v147 = vrcp.pop 32.0
    %v148 = vmul.f32 %v143, %v147
    %v149 = vmul.f32 %v146, %v147
    %v150 = vmul.f32 %v135, %v135
    %v151 = vmul.f32 %v138, %v138
    %v152 = vsel %vm96, %v150, 0.0
    %153 = vadd.xlane.f32.xlu0 %v152
    %v154 = vpop.xlane.xlu0 %153
    %v155 = vsel %vm96, %v151, 0.0
    %156 = vadd.xlane.f32.xlu0 %v155
    %v157 = vpop.xlane.xlu0 %156
    %v158 = vmul.f32 %v154, %v147
    %v159 = vmul.f32 %v157, %v147
    %v160 = vmul.f32 %v148, %v148
    %v161 = vmul.f32 %v149, %v149
    %v162 = vsub.f32 %v158, %v160
    %v163 = vsub.f32 %v159, %v161
    %v164 = vmax.f32 %v162, 0.0
    %v165 = vmax.f32 %v163, 0.0
    %v166 = vadd.f32 %v164, 1e-12
    %v167 = vadd.f32 %v165, 1e-12
    %v168 = vrsqrt.pop %v166
    %v169 = vrsqrt.pop %v167
    %v170 = vsub.f32 %v135, %v148
    %v171 = vsub.f32 %v138, %v149
    %v172 = vmul.f32 %v170, %v168
    %v173 = vmul.f32 %v171, %v169
    %v174 = vld [vmem:[%s4] sm:$0x1]
    %v176 = vlaneseq
    %v177 = vshrl.u32 %v176, 7
    %v178 = vsub.s32 0, %v177
    %v179 = vrot.slane %v174, %v178
    %v181 = vmul.f32 %v172, %v179
    %v182 = vmul.f32 %v173, %v179
    %v183 = vld [vmem:[%s5] sm:$0x1]
    %v185 = vlaneseq
    %v186 = vshrl.u32 %v185, 7
    %v187 = vsub.s32 0, %v186
    %v188 = vrot.slane %v183, %v187
    %v190 = vadd.f32 %v181, %v188
    %v191 = vadd.f32 %v182, %v188
    %192 = vst.msk [vmem:[#allocation8] sm:$0xff] %vm96, %v190
    %193 = vst.msk [vmem:[#allocation8 + $0x8] sm:$0xff] %vm96, %v191
    // Predicated region
    $region38: #{tpu_custom_call.1} parent=1 // pred_check
      _
    $region39: #{tpu_custom_call.1} parent=1 // pred_check_branch
      %195 = sbr.rel (0) target = $region41
    $region40: #{tpu_custom_call.1} parent=1 // pred_region
      %s197 = ssub.s32 256, 256
      %198 = vsyncadd [#allocation4], %s197
      %s199 = sshll.u32 [#allocation8], 4
      %s200 = int_to_ptr.vmem [resolvable:$true] %s199
      %205 = dma.vmem_to_hbm [thread:$0]  %s200, 256, %s6, [#allocation4], 128, 128, 8
    $region41: #{tpu_custom_call.1} parent=1 // pred_fallthru
      _
    // Predicated region
    $region42: #{tpu_custom_call.1} parent=1 // pred_check
      _
    $region43: #{tpu_custom_call.1} parent=1 // pred_check_branch
      %207 = sbr.rel (0) target = $region45
    $region44: #{tpu_custom_call.1} parent=1 // pred_region
      %208 = dma.done [#allocation4], 256
    $region45: #{tpu_custom_call.1} parent=1 // pred_fallthru
      _
    %209 = vsyncpa [#allocation3], 1
    %210 = vsyncpa [#allocation6], 1
    %211 = vsyncpa [#allocation4], 1

</llo_original>
